<compile_context>
chip_gen: v7x
topology: tpu7x:2x2x1
jax: 0.10.0
libtpu: 0.0.40
codegen_flags: <defaults>
</compile_context>

<pallas_src>
import functools

import jax
import jax.numpy as jnp
from jax import lax
from jax.experimental import pallas as pl
from jax.experimental.pallas import tpu as pltpu


def _contrastive_kernel(p_ref, e_ref, c_ref, out_ref,
                        dot_pe_ref, dot_pc_ref, pp_ref, ee_ref, cc_ref,
                        s_cos_ref, s_pos_ref, s_neg_ref,
                        *, tau, batch, emb, tile_b, tile_e,
                        n_b_per_core, n_b_total, mask_e):
    core = pl.program_id(0)   # batch split across TensorCores ("parallel")
    bi = pl.program_id(1)     # batch tile within this core ("arbitrary")
    ej = pl.program_id(2)     # embedding tile ("arbitrary", innermost)

    # Zero this core's scalar accumulators on its first grid step.
    @pl.when((bi == 0) & (ej == 0))
    def _init_scalars():
        s_cos_ref[...] = jnp.zeros_like(s_cos_ref)
        s_pos_ref[...] = jnp.zeros_like(s_pos_ref)
        s_neg_ref[...] = jnp.zeros_like(s_neg_ref)

    # Zero the per-row partial sums at the start of every batch tile.
    @pl.when(ej == 0)
    def _init_rows():
        dot_pe_ref[...] = jnp.zeros_like(dot_pe_ref)
        dot_pc_ref[...] = jnp.zeros_like(dot_pc_ref)
        pp_ref[...] = jnp.zeros_like(pp_ref)
        ee_ref[...] = jnp.zeros_like(ee_ref)
        cc_ref[...] = jnp.zeros_like(cc_ref)

    xp = p_ref[...].astype(jnp.float32)
    xe = e_ref[...].astype(jnp.float32)
    xc = c_ref[...].astype(jnp.float32)

    if mask_e:  # last embedding tile extends past E: zero out-of-range lanes
        col = ej * tile_e + lax.broadcasted_iota(jnp.int32, (tile_b, tile_e), 1)
        lane_ok = col < emb
        zero = jnp.float32(0.0)
        xp = jnp.where(lane_ok, xp, zero)
        xe = jnp.where(lane_ok, xe, zero)
        xc = jnp.where(lane_ok, xc, zero)

    # TODO(synk): if VALU-bound on v7x (bf16, large E), these axis=1 add-trees
    # could be offloaded to the idle MXU via a ones-column matmul.
    dot_pe_ref[...] += jnp.sum(xp * xe, axis=1, keepdims=True)
    dot_pc_ref[...] += jnp.sum(xp * xc, axis=1, keepdims=True)
    pp_ref[...] += jnp.sum(xp * xp, axis=1, keepdims=True)
    ee_ref[...] += jnp.sum(xe * xe, axis=1, keepdims=True)
    cc_ref[...] += jnp.sum(xc * xc, axis=1, keepdims=True)

    # End of the embedding reduction: fold this batch tile into the scalars.
    @pl.when(ej == pl.num_programs(2) - 1)
    def _fold_tile():
        eps2 = jnp.float32(1e-12)          # (1e-6)**2 ; per-norm clamp
        inv_tau = jnp.float32(1.0 / tau)
        pp = jnp.maximum(pp_ref[...], eps2)
        # 1/(max(||p||,eps)*max(||x||,eps)) == rsqrt(max(pp,eps^2)*max(xx,eps^2))
        cos_pos = dot_pe_ref[...] * lax.rsqrt(pp * jnp.maximum(ee_ref[...], eps2))
        cos_neg = dot_pc_ref[...] * lax.rsqrt(pp * jnp.maximum(cc_ref[...], eps2))

        # Mask rows past the true batch (padded last tile / overhanging core).
        raw_blk = core * n_b_per_core + bi
        blk = jnp.minimum(raw_blk, n_b_total - 1)
        row = blk * tile_b + lax.broadcasted_iota(jnp.int32, (tile_b, 1), 0)
        valid = (row < batch) & (raw_blk < n_b_total)

        exp_pos = jnp.where(valid, jnp.exp((cos_pos - 1.0) * inv_tau), 0.0)
        exp_neg = jnp.where(valid, jnp.exp((cos_neg - 1.0) * inv_tau), 0.0)
        cos_pos = jnp.where(valid, cos_pos, 0.0)

        s_cos_ref[...] += jnp.sum(cos_pos, axis=0, keepdims=True)
        s_pos_ref[...] += jnp.sum(exp_pos, axis=0, keepdims=True)
        s_neg_ref[...] += jnp.sum(exp_neg, axis=0, keepdims=True)

    # Last step for this core: emit its partial sums as one (8,128) tile.
    @pl.when((bi == pl.num_programs(1) - 1) & (ej == pl.num_programs(2) - 1))
    def _finalize():
        parts = jnp.concatenate(
            [s_cos_ref[...], s_pos_ref[...], s_neg_ref[...],
             jnp.zeros((5, 1), jnp.float32)], axis=0)            # (8, 1)
        out_ref[...] = jnp.broadcast_to(parts[None, :, :], (1, 8, 128))


def _vmem_capacity_bytes():
    try:
        info = pltpu.get_tpu_info()
        cap = int(getattr(info, "vmem_capacity_bytes", 0))
    except Exception:
        cap = 0
    return cap if cap > 0 else 64 * 1024 * 1024   # conservative (v7x) fallback


def _sublane_multiple(itemsize):
    return max(8, 32 // max(int(itemsize), 1))    # 8 f32 / 16 bf16 / 32 int8


def _pick_tiles(batch, emb, itemsize):
    """Byte-budgeted tiles: 2 pipeline buffers x 3 inputs (stored dtype) plus
    ~6 f32 bytes/element of in-kernel casts/temporaries against real VMEM."""
    cap = _vmem_capacity_bytes()
    budget = int(cap * 0.45)                      # leave headroom for Mosaic
    tile_e = emb if emb <= 512 else 512           # lane-aligned E chunk
    per_elem = 2 * 3 * itemsize + 6 * 4
    max_elems = max(budget // per_elem, 8 * 128)
    sub = _sublane_multiple(itemsize)
    tile_b = max_elems // tile_e
    if tile_b >= batch:
        tile_b = batch                            # single full-batch block
    else:
        tile_b = max(sub, (tile_b // sub) * sub)  # sublane-packed multiple
    return tile_b, tile_e, cap


def contrastive_learning_loss(premise_emb, entailment_emb, contradiction_emb,
                              tau, *, tile_b=None, tile_e=None):
    """premise/entailment/contradiction: (B, E) float arrays -> scalar loss."""
    assert premise_emb.shape == entailment_emb.shape == contradiction_emb.shape
    assert premise_emb.dtype == entailment_emb.dtype == contradiction_emb.dtype
    batch, emb = premise_emb.shape
    itemsize = jnp.dtype(premise_emb.dtype).itemsize
    auto_tb, auto_te, cap = _pick_tiles(batch, emb, itemsize)
    tile_b = auto_tb if tile_b is None else int(tile_b)
    tile_e = auto_te if tile_e is None else int(tile_e)

    sub = _sublane_multiple(itemsize)
    assert tile_b == batch or (tile_b % sub == 0 and tile_b <= batch), tile_b
    assert tile_e == emb or (tile_e % 128 == 0 and tile_e <= emb), tile_e

    n_b_total = pl.cdiv(batch, tile_b)
    n_e = pl.cdiv(emb, tile_e)
    num_splits = 2 if n_b_total >= 2 else 1       # megacore batch split (v7x)
    n_b_per_core = pl.cdiv(n_b_total, num_splits)
    mask_e = (emb % tile_e) != 0

    kernel = functools.partial(
        _contrastive_kernel, tau=float(tau), batch=batch, emb=emb,
        tile_b=tile_b, tile_e=tile_e, n_b_per_core=n_b_per_core,
        n_b_total=n_b_total, mask_e=mask_e)

    def in_map(core, bi, ej):
        blk = jnp.minimum(core * n_b_per_core + bi, n_b_total - 1)
        return (blk, ej)

    in_spec = pl.BlockSpec((tile_b, tile_e), in_map)

    # vmem limit derived from the actual footprint (inputs + f32 temporaries).
    est = ((2 * 3 * itemsize + 6 * 4) * tile_b * tile_e
           + 5 * tile_b * 4 + 2 * 8 * 128 * 4 + (1 << 20))
    vmem_limit = int(min(cap * 0.95, max(2 * est, 32 * 1024 * 1024)))

    partials = pl.pallas_call(
        kernel,
        out_shape=jax.ShapeDtypeStruct((num_splits, 8, 128), jnp.float32),
        grid=(num_splits, n_b_per_core, n_e),
        in_specs=[in_spec, in_spec, in_spec],
        out_specs=pl.BlockSpec((1, 8, 128), lambda core, bi, ej: (core, 0, 0)),
        scratch_shapes=[pltpu.VMEM((tile_b, 1), jnp.float32)] * 5
                      + [pltpu.VMEM((1, 1), jnp.float32)] * 3,
        compiler_params=pltpu.CompilerParams(
            dimension_semantics=("parallel", "arbitrary", "arbitrary"),
            vmem_limit_bytes=vmem_limit,
        ),
    )(premise_emb, entailment_emb, contradiction_emb)

    s_cos = jnp.sum(partials[:, 0, 0])
    s_pos = jnp.sum(partials[:, 1, 0])
    s_neg = jnp.sum(partials[:, 2, 0])
    inv_tau = 1.0 / float(tau)
    # loss = mean_b(-log(exp(cos_pos/tau) / denom)), denom summed over batch.
    return inv_tau + jnp.log(s_pos + s_neg) - s_cos * (inv_tau / batch)


def _reference_loss(p, e, c, tau, eps=1e-6):
    """Pure-JAX mirror of the PyTorch forward (per-norm eps clamp)."""
    def cos(a, b):
        na = jnp.maximum(jnp.sqrt(jnp.sum(a * a, axis=1)), eps)
        nb = jnp.maximum(jnp.sqrt(jnp.sum(b * b, axis=1)), eps)
        return jnp.sum(a * b, axis=1) / (na * nb)
    lp = jnp.exp(cos(p, e) / tau)
    ln = jnp.exp(cos(p, c) / tau)
    denom = jnp.sum(lp) + jnp.sum(ln)
    return jnp.mean(-jnp.log(lp / denom))


if __name__ == "__main__":
    tau = 0.05

    # Case 1: small f32 problem, single tile, single core slice.
    B, E = 8, 32
    kp, ke, kc = jax.random.split(jax.random.PRNGKey(0), 3)
    premise = jax.random.normal(kp, (B, E), dtype=jnp.float32)
    entailment = jax.random.normal(ke, (B, E), dtype=jnp.float32)
    contradiction = jax.random.normal(kc, (B, E), dtype=jnp.float32)
    loss = jax.block_until_ready(
        contrastive_learning_loss(premise, entailment, contradiction, tau))
    ref = _reference_loss(premise, entailment, contradiction, tau)
    assert jnp.allclose(loss, ref, rtol=1e-4, atol=1e-5), (loss, ref)

    # Case 2: bf16, 2 batch tiles (parallel core split), E tiling with lane
    # masking (B % tile_b != 0 and E % tile_e != 0).
    B2, E2 = 24, 192
    k2p, k2e, k2c = jax.random.split(jax.random.PRNGKey(0), 3)
    p2 = jax.random.normal(k2p, (B2, E2), dtype=jnp.float32).astype(jnp.bfloat16)
    e2 = jax.random.normal(k2e, (B2, E2), dtype=jnp.float32).astype(jnp.bfloat16)
    c2 = jax.random.normal(k2c, (B2, E2), dtype=jnp.float32).astype(jnp.bfloat16)
    loss2 = jax.block_until_ready(
        contrastive_learning_loss(p2, e2, c2, tau, tile_b=16, tile_e=128))
    ref2 = _reference_loss(p2.astype(jnp.float32), e2.astype(jnp.float32),
                           c2.astype(jnp.float32), tau)
    assert jnp.allclose(loss2, ref2, rtol=1e-4, atol=1e-4), (loss2, ref2)

    print("KERNEL_OK")
</pallas_src>

<mosaic_0001>
module attributes {stable_mosaic.version = 11 : i64} {
  func.func @_contrastive_kernel(%arg0: i32, %arg1: i32, %arg2: i32, %arg3: memref<8x32xf32, #tpu.memory_space<vmem>>, %arg4: memref<8x32xf32, #tpu.memory_space<vmem>>, %arg5: memref<8x32xf32, #tpu.memory_space<vmem>>, %arg6: memref<1x8x128xf32, #tpu.memory_space<vmem>>, %arg7: memref<8x1xf32, #tpu.memory_space<vmem>>, %arg8: memref<8x1xf32, #tpu.memory_space<vmem>>, %arg9: memref<8x1xf32, #tpu.memory_space<vmem>>, %arg10: memref<8x1xf32, #tpu.memory_space<vmem>>, %arg11: memref<8x1xf32, #tpu.memory_space<vmem>>, %arg12: memref<1x1xf32, #tpu.memory_space<vmem>>, %arg13: memref<1x1xf32, #tpu.memory_space<vmem>>, %arg14: memref<1x1xf32, #tpu.memory_space<vmem>>) attributes {dimension_semantics = [#tpu.dimension_semantics<parallel>, #tpu.dimension_semantics<arbitrary>, #tpu.dimension_semantics<arbitrary>], iteration_bounds = array<i64: 1, 1, 1>, scalar_prefetch = 0 : i64, scratch_operands = 8 : i64, tpu.core_type = #tpu.core_type<tc>, window_params = [{transform_indices = @transform_0, window_bounds = array<i64: 8, 32>}, {transform_indices = @transform_1, window_bounds = array<i64: 8, 32>}, {transform_indices = @transform_2, window_bounds = array<i64: 8, 32>}, {transform_indices = @transform_3, window_bounds = array<i64: 1, 8, 128>}]} {
    %c0_i32 = arith.constant 0 : i32
    %0 = arith.cmpi eq, %arg1, %c0_i32 : i32
    %c0_i32_0 = arith.constant 0 : i32
    %1 = arith.cmpi eq, %arg2, %c0_i32_0 : i32
    %2 = arith.andi %0, %1 : i1
    %3 = arith.extui %2 : i1 to i32
    %c0_i32_1 = arith.constant 0 : i32
    %4 = arith.cmpi ne, %3, %c0_i32_1 : i32
    scf.if %4 {
      %cst_38 = arith.constant 0.000000e+00 : f32
      %49 = vector.broadcast %cst_38 : f32 to vector<1x1xf32>
      %c0_39 = arith.constant 0 : index
      %c0_40 = arith.constant 0 : index
      %50 = vector.load %arg12[%c0_39, %c0_40] : memref<1x1xf32, #tpu.memory_space<vmem>>, vector<1x1xf32>
      tpu.vector_store %arg12[%c0_39, %c0_40], %49 {strides = array<i32>} : memref<1x1xf32, #tpu.memory_space<vmem>>, vector<1x1xf32>,
      %cst_41 = arith.constant 0.000000e+00 : f32
      %51 = vector.broadcast %cst_41 : f32 to vector<1x1xf32>
      %c0_42 = arith.constant 0 : index
      %c0_43 = arith.constant 0 : index
      %52 = vector.load %arg13[%c0_42, %c0_43] : memref<1x1xf32, #tpu.memory_space<vmem>>, vector<1x1xf32>
      tpu.vector_store %arg13[%c0_42, %c0_43], %51 {strides = array<i32>} : memref<1x1xf32, #tpu.memory_space<vmem>>, vector<1x1xf32>,
      %cst_44 = arith.constant 0.000000e+00 : f32
      %53 = vector.broadcast %cst_44 : f32 to vector<1x1xf32>
      %c0_45 = arith.constant 0 : index
      %c0_46 = arith.constant 0 : index
      %54 = vector.load %arg14[%c0_45, %c0_46] : memref<1x1xf32, #tpu.memory_space<vmem>>, vector<1x1xf32>
      tpu.vector_store %arg14[%c0_45, %c0_46], %53 {strides = array<i32>} : memref<1x1xf32, #tpu.memory_space<vmem>>, vector<1x1xf32>,
    } else {
    }
    %c0_i32_2 = arith.constant 0 : i32
    %5 = arith.cmpi eq, %arg2, %c0_i32_2 : i32
    %6 = arith.extui %5 : i1 to i32
    %c0_i32_3 = arith.constant 0 : i32
    %7 = arith.cmpi ne, %6, %c0_i32_3 : i32
    scf.if %7 {
      %cst_38 = arith.constant 0.000000e+00 : f32
      %49 = vector.broadcast %cst_38 : f32 to vector<8x1xf32>
      %c0_39 = arith.constant 0 : index
      %c0_40 = arith.constant 0 : index
      %50 = vector.load %arg7[%c0_39, %c0_40] : memref<8x1xf32, #tpu.memory_space<vmem>>, vector<8x1xf32>
      tpu.vector_store %arg7[%c0_39, %c0_40], %49 {strides = array<i32>} : memref<8x1xf32, #tpu.memory_space<vmem>>, vector<8x1xf32>,
      %cst_41 = arith.constant 0.000000e+00 : f32
      %51 = vector.broadcast %cst_41 : f32 to vector<8x1xf32>
      %c0_42 = arith.constant 0 : index
      %c0_43 = arith.constant 0 : index
      %52 = vector.load %arg8[%c0_42, %c0_43] : memref<8x1xf32, #tpu.memory_space<vmem>>, vector<8x1xf32>
      tpu.vector_store %arg8[%c0_42, %c0_43], %51 {strides = array<i32>} : memref<8x1xf32, #tpu.memory_space<vmem>>, vector<8x1xf32>,
      %cst_44 = arith.constant 0.000000e+00 : f32
      %53 = vector.broadcast %cst_44 : f32 to vector<8x1xf32>
      %c0_45 = arith.constant 0 : index
      %c0_46 = arith.constant 0 : index
      %54 = vector.load %arg9[%c0_45, %c0_46] : memref<8x1xf32, #tpu.memory_space<vmem>>, vector<8x1xf32>
      tpu.vector_store %arg9[%c0_45, %c0_46], %53 {strides = array<i32>} : memref<8x1xf32, #tpu.memory_space<vmem>>, vector<8x1xf32>,
      %cst_47 = arith.constant 0.000000e+00 : f32
      %55 = vector.broadcast %cst_47 : f32 to vector<8x1xf32>
      %c0_48 = arith.constant 0 : index
      %c0_49 = arith.constant 0 : index
      %56 = vector.load %arg10[%c0_48, %c0_49] : memref<8x1xf32, #tpu.memory_space<vmem>>, vector<8x1xf32>
      tpu.vector_store %arg10[%c0_48, %c0_49], %55 {strides = array<i32>} : memref<8x1xf32, #tpu.memory_space<vmem>>, vector<8x1xf32>,
      %cst_50 = arith.constant 0.000000e+00 : f32
      %57 = vector.broadcast %cst_50 : f32 to vector<8x1xf32>
      %c0_51 = arith.constant 0 : index
      %c0_52 = arith.constant 0 : index
      %58 = vector.load %arg11[%c0_51, %c0_52] : memref<8x1xf32, #tpu.memory_space<vmem>>, vector<8x1xf32>
      tpu.vector_store %arg11[%c0_51, %c0_52], %57 {strides = array<i32>} : memref<8x1xf32, #tpu.memory_space<vmem>>, vector<8x1xf32>,
    } else {
    }
    %c0 = arith.constant 0 : index
    %c0_4 = arith.constant 0 : index
    %8 = vector.load %arg3[%c0, %c0_4] : memref<8x32xf32, #tpu.memory_space<vmem>>, vector<8x32xf32>
    %c0_5 = arith.constant 0 : index
    %c0_6 = arith.constant 0 : index
    %9 = vector.load %arg4[%c0_5, %c0_6] : memref<8x32xf32, #tpu.memory_space<vmem>>, vector<8x32xf32>
    %c0_7 = arith.constant 0 : index
    %c0_8 = arith.constant 0 : index
    %10 = vector.load %arg5[%c0_7, %c0_8] : memref<8x32xf32, #tpu.memory_space<vmem>>, vector<8x32xf32>
    %c0_9 = arith.constant 0 : index
    %c0_10 = arith.constant 0 : index
    %11 = vector.load %arg7[%c0_9, %c0_10] : memref<8x1xf32, #tpu.memory_space<vmem>>, vector<8x1xf32>
    %12 = arith.mulf %8, %9 : vector<8x32xf32>
    %cst = arith.constant dense<0.000000e+00> : vector<8xf32>
    %13 = vector.multi_reduction <add>, %12, %cst [1] : vector<8x32xf32> to vector<8xf32>
    %14 = vector.shape_cast %13 : vector<8xf32> to vector<8x1xf32>
    %15 = arith.addf %11, %14 : vector<8x1xf32>
    %c0_11 = arith.constant 0 : index
    %c0_12 = arith.constant 0 : index
    %16 = vector.load %arg7[%c0_11, %c0_12] : memref<8x1xf32, #tpu.memory_space<vmem>>, vector<8x1xf32>
    tpu.vector_store %arg7[%c0_11, %c0_12], %15 {strides = array<i32>} : memref<8x1xf32, #tpu.memory_space<vmem>>, vector<8x1xf32>,
    %c0_13 = arith.constant 0 : index
    %c0_14 = arith.constant 0 : index
    %17 = vector.load %arg8[%c0_13, %c0_14] : memref<8x1xf32, #tpu.memory_space<vmem>>, vector<8x1xf32>
    %18 = arith.mulf %8, %10 : vector<8x32xf32>
    %cst_15 = arith.constant dense<0.000000e+00> : vector<8xf32>
    %19 = vector.multi_reduction <add>, %18, %cst_15 [1] : vector<8x32xf32> to vector<8xf32>
    %20 = vector.shape_cast %19 : vector<8xf32> to vector<8x1xf32>
    %21 = arith.addf %17, %20 : vector<8x1xf32>
    %c0_16 = arith.constant 0 : index
    %c0_17 = arith.constant 0 : index
    %22 = vector.load %arg8[%c0_16, %c0_17] : memref<8x1xf32, #tpu.memory_space<vmem>>, vector<8x1xf32>
    tpu.vector_store %arg8[%c0_16, %c0_17], %21 {strides = array<i32>} : memref<8x1xf32, #tpu.memory_space<vmem>>, vector<8x1xf32>,
    %c0_18 = arith.constant 0 : index
    %c0_19 = arith.constant 0 : index
    %23 = vector.load %arg9[%c0_18, %c0_19] : memref<8x1xf32, #tpu.memory_space<vmem>>, vector<8x1xf32>
    %24 = arith.mulf %8, %8 : vector<8x32xf32>
    %cst_20 = arith.constant dense<0.000000e+00> : vector<8xf32>
    %25 = vector.multi_reduction <add>, %24, %cst_20 [1] : vector<8x32xf32> to vector<8xf32>
    %26 = vector.shape_cast %25 : vector<8xf32> to vector<8x1xf32>
    %27 = arith.addf %23, %26 : vector<8x1xf32>
    %c0_21 = arith.constant 0 : index
    %c0_22 = arith.constant 0 : index
    %28 = vector.load %arg9[%c0_21, %c0_22] : memref<8x1xf32, #tpu.memory_space<vmem>>, vector<8x1xf32>
    tpu.vector_store %arg9[%c0_21, %c0_22], %27 {strides = array<i32>} : memref<8x1xf32, #tpu.memory_space<vmem>>, vector<8x1xf32>,
    %c0_23 = arith.constant 0 : index
    %c0_24 = arith.constant 0 : index
    %29 = vector.load %arg10[%c0_23, %c0_24] : memref<8x1xf32, #tpu.memory_space<vmem>>, vector<8x1xf32>
    %30 = arith.mulf %9, %9 : vector<8x32xf32>
    %cst_25 = arith.constant dense<0.000000e+00> : vector<8xf32>
    %31 = vector.multi_reduction <add>, %30, %cst_25 [1] : vector<8x32xf32> to vector<8xf32>
    %32 = vector.shape_cast %31 : vector<8xf32> to vector<8x1xf32>
    %33 = arith.addf %29, %32 : vector<8x1xf32>
    %c0_26 = arith.constant 0 : index
    %c0_27 = arith.constant 0 : index
    %34 = vector.load %arg10[%c0_26, %c0_27] : memref<8x1xf32, #tpu.memory_space<vmem>>, vector<8x1xf32>
    tpu.vector_store %arg10[%c0_26, %c0_27], %33 {strides = array<i32>} : memref<8x1xf32, #tpu.memory_space<vmem>>, vector<8x1xf32>,
    %c0_28 = arith.constant 0 : index
    %c0_29 = arith.constant 0 : index
    %35 = vector.load %arg11[%c0_28, %c0_29] : memref<8x1xf32, #tpu.memory_space<vmem>>, vector<8x1xf32>
    %36 = arith.mulf %10, %10 : vector<8x32xf32>
    %cst_30 = arith.constant dense<0.000000e+00> : vector<8xf32>
    %37 = vector.multi_reduction <add>, %36, %cst_30 [1] : vector<8x32xf32> to vector<8xf32>
    %38 = vector.shape_cast %37 : vector<8xf32> to vector<8x1xf32>
    %39 = arith.addf %35, %38 : vector<8x1xf32>
    %c0_31 = arith.constant 0 : index
    %c0_32 = arith.constant 0 : index
    %40 = vector.load %arg11[%c0_31, %c0_32] : memref<8x1xf32, #tpu.memory_space<vmem>>, vector<8x1xf32>
    tpu.vector_store %arg11[%c0_31, %c0_32], %39 {strides = array<i32>} : memref<8x1xf32, #tpu.memory_space<vmem>>, vector<8x1xf32>,
    %c0_i32_33 = arith.constant 0 : i32
    %41 = arith.cmpi eq, %arg2, %c0_i32_33 : i32
    %42 = arith.extui %41 : i1 to i32
    %c0_i32_34 = arith.constant 0 : i32
    %43 = arith.cmpi ne, %42, %c0_i32_34 : i32
    scf.if %43 {
      %c0_38 = arith.constant 0 : index
      %c0_39 = arith.constant 0 : index
      %49 = vector.load %arg9[%c0_38, %c0_39] : memref<8x1xf32, #tpu.memory_space<vmem>>, vector<8x1xf32>
      %cst_40 = arith.constant 9.99999996E-13 : f32
      %50 = vector.broadcast %cst_40 : f32 to vector<8x1xf32>
      %51 = arith.maximumf %49, %50 : vector<8x1xf32>
      %c0_41 = arith.constant 0 : index
      %c0_42 = arith.constant 0 : index
      %52 = vector.load %arg7[%c0_41, %c0_42] : memref<8x1xf32, #tpu.memory_space<vmem>>, vector<8x1xf32>
      %c0_43 = arith.constant 0 : index
      %c0_44 = arith.constant 0 : index
      %53 = vector.load %arg10[%c0_43, %c0_44] : memref<8x1xf32, #tpu.memory_space<vmem>>, vector<8x1xf32>
      %cst_45 = arith.constant 9.99999996E-13 : f32
      %54 = vector.broadcast %cst_45 : f32 to vector<8x1xf32>
      %55 = arith.maximumf %53, %54 : vector<8x1xf32>
      %56 = arith.mulf %51, %55 : vector<8x1xf32>
      %57 = math.rsqrt %56 : vector<8x1xf32>
      %58 = arith.mulf %52, %57 : vector<8x1xf32>
      %c0_46 = arith.constant 0 : index
      %c0_47 = arith.constant 0 : index
      %59 = vector.load %arg8[%c0_46, %c0_47] : memref<8x1xf32, #tpu.memory_space<vmem>>, vector<8x1xf32>
      %c0_48 = arith.constant 0 : index
      %c0_49 = arith.constant 0 : index
      %60 = vector.load %arg11[%c0_48, %c0_49] : memref<8x1xf32, #tpu.memory_space<vmem>>, vector<8x1xf32>
      %cst_50 = arith.constant 9.99999996E-13 : f32
      %61 = vector.broadcast %cst_50 : f32 to vector<8x1xf32>
      %62 = arith.maximumf %60, %61 : vector<8x1xf32>
      %63 = arith.mulf %51, %62 : vector<8x1xf32>
      %64 = math.rsqrt %63 : vector<8x1xf32>
      %65 = arith.mulf %59, %64 : vector<8x1xf32>
      %c1_i32 = arith.constant 1 : i32
      %66 = arith.muli %arg0, %c1_i32 : i32
      %67 = arith.addi %66, %arg1 : i32
      %c0_i32_51 = arith.constant 0 : i32
      %68 = arith.minsi %67, %c0_i32_51 : i32
      %c8_i32 = arith.constant 8 : i32
      %69 = arith.muli %68, %c8_i32 : i32
      %70 = tpu.iota {dimensions = array<i32: 0>} : vector<8x1xi32>
      %71 = vector.broadcast %69 : i32 to vector<8x1xi32>
      %72 = arith.addi %71, %70 : vector<8x1xi32>
      %c8_i32_52 = arith.constant 8 : i32
      %73 = vector.broadcast %c8_i32_52 : i32 to vector<8x1xi32>
      %74 = arith.cmpi slt, %72, %73 : vector<8x1xi32>
      %c1_i32_53 = arith.constant 1 : i32
      %75 = arith.cmpi slt, %67, %c1_i32_53 : i32
      %76 = vector.broadcast %75 : i1 to vector<8x1xi1>
      %77 = arith.andi %74, %76 : vector<8x1xi1>
      %cst_54 = arith.constant 1.000000e+00 : f32
      %78 = vector.broadcast %cst_54 : f32 to vector<8x1xf32>
      %79 = arith.subf %58, %78 : vector<8x1xf32>
      %cst_55 = arith.constant 2.000000e+01 : f32
      %80 = vector.broadcast %cst_55 : f32 to vector<8x1xf32>
      %81 = arith.mulf %79, %80 : vector<8x1xf32>
      %82 = math.exp %81 : vector<8x1xf32>
      %cst_56 = arith.constant 0.000000e+00 : f32
      %83 = vector.broadcast %cst_56 : f32 to vector<8x1xf32>
      %84 = arith.select %77, %82, %83 : vector<8x1xi1>, vector<8x1xf32>
      %cst_57 = arith.constant 1.000000e+00 : f32
      %85 = vector.broadcast %cst_57 : f32 to vector<8x1xf32>
      %86 = arith.subf %65, %85 : vector<8x1xf32>
      %cst_58 = arith.constant 2.000000e+01 : f32
      %87 = vector.broadcast %cst_58 : f32 to vector<8x1xf32>
      %88 = arith.mulf %86, %87 : vector<8x1xf32>
      %89 = math.exp %88 : vector<8x1xf32>
      %cst_59 = arith.constant 0.000000e+00 : f32
      %90 = vector.broadcast %cst_59 : f32 to vector<8x1xf32>
      %91 = arith.select %77, %89, %90 : vector<8x1xi1>, vector<8x1xf32>
      %cst_60 = arith.constant 0.000000e+00 : f32
      %92 = vector.broadcast %cst_60 : f32 to vector<8x1xf32>
      %93 = arith.select %77, %58, %92 : vector<8x1xi1>, vector<8x1xf32>
      %c0_61 = arith.constant 0 : index
      %c0_62 = arith.constant 0 : index
      %94 = vector.load %arg12[%c0_61, %c0_62] : memref<1x1xf32, #tpu.memory_space<vmem>>, vector<1x1xf32>
      %cst_63 = arith.constant dense<0.000000e+00> : vector<1xf32>
      %95 = vector.multi_reduction <add>, %93, %cst_63 [0] : vector<8x1xf32> to vector<1xf32>
      %96 = vector.shape_cast %95 : vector<1xf32> to vector<1x1xf32>
      %97 = arith.addf %94, %96 : vector<1x1xf32>
      %c0_64 = arith.constant 0 : index
      %c0_65 = arith.constant 0 : index
      %98 = vector.load %arg12[%c0_64, %c0_65] : memref<1x1xf32, #tpu.memory_space<vmem>>, vector<1x1xf32>
      tpu.vector_store %arg12[%c0_64, %c0_65], %97 {strides = array<i32>} : memref<1x1xf32, #tpu.memory_space<vmem>>, vector<1x1xf32>,
      %c0_66 = arith.constant 0 : index
      %c0_67 = arith.constant 0 : index
      %99 = vector.load %arg13[%c0_66, %c0_67] : memref<1x1xf32, #tpu.memory_space<vmem>>, vector<1x1xf32>
      %cst_68 = arith.constant dense<0.000000e+00> : vector<1xf32>
      %100 = vector.multi_reduction <add>, %84, %cst_68 [0] : vector<8x1xf32> to vector<1xf32>
      %101 = vector.shape_cast %100 : vector<1xf32> to vector<1x1xf32>
      %102 = arith.addf %99, %101 : vector<1x1xf32>
      %c0_69 = arith.constant 0 : index
      %c0_70 = arith.constant 0 : index
      %103 = vector.load %arg13[%c0_69, %c0_70] : memref<1x1xf32, #tpu.memory_space<vmem>>, vector<1x1xf32>
      tpu.vector_store %arg13[%c0_69, %c0_70], %102 {strides = array<i32>} : memref<1x1xf32, #tpu.memory_space<vmem>>, vector<1x1xf32>,
      %c0_71 = arith.constant 0 : index
      %c0_72 = arith.constant 0 : index
      %104 = vector.load %arg14[%c0_71, %c0_72] : memref<1x1xf32, #tpu.memory_space<vmem>>, vector<1x1xf32>
      %cst_73 = arith.constant dense<0.000000e+00> : vector<1xf32>
      %105 = vector.multi_reduction <add>, %91, %cst_73 [0] : vector<8x1xf32> to vector<1xf32>
      %106 = vector.shape_cast %105 : vector<1xf32> to vector<1x1xf32>
      %107 = arith.addf %104, %106 : vector<1x1xf32>
      %c0_74 = arith.constant 0 : index
      %c0_75 = arith.constant 0 : index
      %108 = vector.load %arg14[%c0_74, %c0_75] : memref<1x1xf32, #tpu.memory_space<vmem>>, vector<1x1xf32>
      tpu.vector_store %arg14[%c0_74, %c0_75], %107 {strides = array<i32>} : memref<1x1xf32, #tpu.memory_space<vmem>>, vector<1x1xf32>,
    } else {
    }
    %c0_i32_35 = arith.constant 0 : i32
    %44 = arith.cmpi eq, %arg1, %c0_i32_35 : i32
    %c0_i32_36 = arith.constant 0 : i32
    %45 = arith.cmpi eq, %arg2, %c0_i32_36 : i32
    %46 = arith.andi %44, %45 : i1
    %47 = arith.extui %46 : i1 to i32
    %c0_i32_37 = arith.constant 0 : i32
    %48 = arith.cmpi ne, %47, %c0_i32_37 : i32
    scf.if %48 {
      %c0_38 = arith.constant 0 : index
      %c0_39 = arith.constant 0 : index
      %49 = vector.load %arg12[%c0_38, %c0_39] : memref<1x1xf32, #tpu.memory_space<vmem>>, vector<1x1xf32>
      %c0_40 = arith.constant 0 : index
      %c0_41 = arith.constant 0 : index
      %50 = vector.load %arg13[%c0_40, %c0_41] : memref<1x1xf32, #tpu.memory_space<vmem>>, vector<1x1xf32>
      %c0_42 = arith.constant 0 : index
      %c0_43 = arith.constant 0 : index
      %51 = vector.load %arg14[%c0_42, %c0_43] : memref<1x1xf32, #tpu.memory_space<vmem>>, vector<1x1xf32>
      %cst_44 = arith.constant 0.000000e+00 : f32
      %52 = vector.broadcast %cst_44 : f32 to vector<5x1xf32>
      %53 = tpu.concatenate %49, %50, %51, %52 in 0 : vector<1x1xf32>, vector<1x1xf32>, vector<1x1xf32>, vector<5x1xf32> -> vector<8x1xf32>
      %54 = vector.shape_cast %53 : vector<8x1xf32> to vector<1x8x1xf32>
      %55 = vector.shape_cast %54 : vector<1x8x1xf32> to vector<1x8x1xf32>
      %56 = vector.broadcast %55 : vector<1x8x1xf32> to vector<1x8x128xf32>
      %c0_45 = arith.constant 0 : index
      %c0_46 = arith.constant 0 : index
      %c0_47 = arith.constant 0 : index
      %57 = vector.load %arg6[%c0_45, %c0_46, %c0_47] : memref<1x8x128xf32, #tpu.memory_space<vmem>>, vector<1x8x128xf32>
      tpu.vector_store %arg6[%c0_45, %c0_46, %c0_47], %56 {strides = array<i32>} : memref<1x8x128xf32, #tpu.memory_space<vmem>>, vector<1x8x128xf32>,
    } else {
    }
    return
  }
  func.func @transform_0(%arg0: i32, %arg1: i32, %arg2: i32) -> (i32, i32) {
    %c1_i32 = arith.constant 1 : i32
    %0 = arith.muli %arg0, %c1_i32 : i32
    %1 = arith.addi %0, %arg1 : i32
    %c0_i32 = arith.constant 0 : i32
    %2 = arith.minsi %1, %c0_i32 : i32
    %c0_i32_0 = arith.constant 0 : i32
    return %2, %arg2 : i32, i32
  }
  func.func @transform_1(%arg0: i32, %arg1: i32, %arg2: i32) -> (i32, i32) {
    %c1_i32 = arith.constant 1 : i32
    %0 = arith.muli %arg0, %c1_i32 : i32
    %1 = arith.addi %0, %arg1 : i32
    %c0_i32 = arith.constant 0 : i32
    %2 = arith.minsi %1, %c0_i32 : i32
    %c0_i32_0 = arith.constant 0 : i32
    return %2, %arg2 : i32, i32
  }
  func.func @transform_2(%arg0: i32, %arg1: i32, %arg2: i32) -> (i32, i32) {
    %c1_i32 = arith.constant 1 : i32
    %0 = arith.muli %arg0, %c1_i32 : i32
    %1 = arith.addi %0, %arg1 : i32
    %c0_i32 = arith.constant 0 : i32
    %2 = arith.minsi %1, %c0_i32 : i32
    %c0_i32_0 = arith.constant 0 : i32
    return %2, %arg2 : i32, i32
  }
  func.func @transform_3(%arg0: i32, %arg1: i32, %arg2: i32) -> (i32, i32, i32) {
    %c0_i32 = arith.constant 0 : i32
    %c0_i32_0 = arith.constant 0 : i32
    %c0_i32_1 = arith.constant 0 : i32
    return %arg0, %c0_i32, %c0_i32_0 : i32, i32, i32
  }
}

</mosaic_0001>

<llo_original>
// kernel: tpu_custom_call.1
$region0: #{tpu_custom_call.1}
  #allocation0 [shape = 'u32[]', space=smem, size = 0x4, offset = 0x4, fixed_abs, tag = 'smem constant byte address 0x4 - core index']
  #allocation1 [shape = 'u32[144,128]{1,0:T(1,128)}', space=vmem, size = 0x12000, scoped, tag = 'internal scratch']
  #allocation2 [shape = 'f32[8,1]{1,0:T(8,128)}', space=vmem, size = 0x1000, scoped, tag = 'scratch operand']
  #allocation3 [shape = 'f32[8,1]{1,0:T(8,128)}', space=vmem, size = 0x1000, scoped, tag = 'scratch operand']
  #allocation4 [shape = 'f32[8,1]{1,0:T(8,128)}', space=vmem, size = 0x1000, scoped, tag = 'scratch operand']
  #allocation5 [shape = 'f32[8,1]{1,0:T(8,128)}', space=vmem, size = 0x1000, scoped, tag = 'scratch operand']
  #allocation6 [shape = 'f32[8,1]{1,0:T(8,128)}', space=vmem, size = 0x1000, scoped, tag = 'scratch operand']
  #allocation7 [shape = 'f32[1,1]{1,0:T(1,128)}', space=vmem, size = 0x200, scoped, tag = 'scratch operand']
  #allocation8 [shape = 'f32[1,1]{1,0:T(1,128)}', space=vmem, size = 0x200, scoped, tag = 'scratch operand']
  #allocation9 [shape = 'f32[1,1]{1,0:T(1,128)}', space=vmem, size = 0x200, scoped, tag = 'scratch operand']
  %s0 = inlined_call_operand.hbm [shape: f32[8,32], index: 0, kind: input, shape index: {}]
  %s1 = inlined_call_operand.hbm [shape: f32[8,32], index: 1, kind: input, shape index: {}]
  %s2 = inlined_call_operand.hbm [shape: f32[8,32], index: 2, kind: input, shape index: {}]
  %s3 = inlined_call_operand.hbm [shape: f32[1,8,128], index: 3, kind: output, shape index: {}]
  %s4 = sld [smem:[#allocation0]]
  $region50: #{tpu_custom_call.1} parent=0
    _
  %s6 = ssub.s32 1, %s4
  %s7 = scalar_select 0, %s6, %s4
  $region1: #{tpu_custom_call.1} parent=0
    #allocation10 [shape = 'u8[4096]{0}', space=vmem, size = 0x1000, scoped, tag = 'input window, operand 0, single buffered']
    #allocation11 [shape = 's32[1]{0}', space=sflag, size = 0x4, scoped, tag = 'scoped memory for tpu_custom_call.1']
    #allocation12 [shape = 's32[1]{0}', space=sflag, size = 0x4, scoped, tag = 'scoped memory for tpu_custom_call.1']
    #allocation13 [shape = 'u8[4096]{0}', space=vmem, size = 0x1000, scoped, tag = 'input window, operand 1, single buffered']
    #allocation14 [shape = 's32[1]{0}', space=sflag, size = 0x4, scoped, tag = 'scoped memory for tpu_custom_call.1']
    #allocation15 [shape = 'u8[4096]{0}', space=vmem, size = 0x1000, scoped, tag = 'input window, operand 2, single buffered']
    #allocation16 [shape = 'u8[4096]{0}', space=vmem, size = 0x1000, scoped, tag = 'output window, operand 0, single buffered']
    %8 = vsyncpa [#allocation11], 0
    %9 = vsyncpa [#allocation14], 0
    %10 = vsyncpa [#allocation12], 0
    // Predicated region
    $region2: #{tpu_custom_call.1} parent=1 // pred_check
      _
    $region3: #{tpu_custom_call.1} parent=1 // pred_check_branch
      %12 = sbr.rel (0) target = $region5
    $region4: #{tpu_custom_call.1} parent=1 // pred_region
      %s13 = sadd.s32 0, 0
      %p14 = scmp.lt.s32.totalorder %s13, 0
      %s15 = scalar_select %p14, %s13, 0
      %s17 = ssub.s32 128, 128
      %18 = vsyncadd [#allocation11], %s17
      %s19 = smul.addr %s15, 128
      %s20 = scalar_lea.hbm %s0, %s19
      %s22 = sshll.u32 [#allocation10], 4
      %s23 = int_to_ptr.vmem [resolvable:$true] %s22
      %25 = dma.hbm_to_vmem [thread:$0]  %s20, 128, %s23, [#allocation11]
    $region5: #{tpu_custom_call.1} parent=1 // pred_fallthru
      _
    // Predicated region
    $region6: #{tpu_custom_call.1} parent=1 // pred_check
      _
    $region7: #{tpu_custom_call.1} parent=1 // pred_check_branch
      %27 = sbr.rel (0) target = $region9
    $region8: #{tpu_custom_call.1} parent=1 // pred_region
      %s28 = sadd.s32 0, 0
      %p29 = scmp.lt.s32.totalorder %s28, 0
      %s30 = scalar_select %p29, %s28, 0
      %s32 = ssub.s32 128, 128
      %33 = vsyncadd [#allocation14], %s32
      %s34 = smul.addr %s30, 128
      %s35 = scalar_lea.hbm %s1, %s34
      %s37 = sshll.u32 [#allocation13], 4
      %s38 = int_to_ptr.vmem [resolvable:$true] %s37
      %40 = dma.hbm_to_vmem [thread:$0]  %s35, 128, %s38, [#allocation14]
    $region9: #{tpu_custom_call.1} parent=1 // pred_fallthru
      _
    // Predicated region
    $region10: #{tpu_custom_call.1} parent=1 // pred_check
      _
    $region11: #{tpu_custom_call.1} parent=1 // pred_check_branch
      %42 = sbr.rel (0) target = $region13
    $region12: #{tpu_custom_call.1} parent=1 // pred_region
      %s43 = sadd.s32 0, 0
      %p44 = scmp.lt.s32.totalorder %s43, 0
      %s45 = scalar_select %p44, %s43, 0
      %s47 = ssub.s32 128, 128
      %48 = vsyncadd [#allocation14], %s47
      %s49 = smul.addr %s45, 128
      %s50 = scalar_lea.hbm %s2, %s49
      %s52 = sshll.u32 [#allocation15], 4
      %s53 = int_to_ptr.vmem [resolvable:$true] %s52
      %55 = dma.hbm_to_vmem [thread:$0]  %s50, 128, %s53, [#allocation14]
    $region13: #{tpu_custom_call.1} parent=1 // pred_fallthru
      _
    // Predicated region
    $region14: #{tpu_custom_call.1} parent=1 // pred_check
      _
    $region15: #{tpu_custom_call.1} parent=1 // pred_check_branch
      %57 = sbr.rel (0) target = $region17
    $region16: #{tpu_custom_call.1} parent=1 // pred_region
      %58 = dma.done [#allocation11], 128
    $region17: #{tpu_custom_call.1} parent=1 // pred_fallthru
      _
    // Predicated region
    $region18: #{tpu_custom_call.1} parent=1 // pred_check
      _
    $region19: #{tpu_custom_call.1} parent=1 // pred_check_branch
      %60 = sbr.rel (0) target = $region21
    $region20: #{tpu_custom_call.1} parent=1 // pred_region
      %61 = dma.done [#allocation14], 128
    $region21: #{tpu_custom_call.1} parent=1 // pred_fallthru
      _
    // Predicated region
    $region22: #{tpu_custom_call.1} parent=1 // pred_check
      _
    $region23: #{tpu_custom_call.1} parent=1 // pred_check_branch
      %63 = sbr.rel (0) target = $region25
    $region24: #{tpu_custom_call.1} parent=1 // pred_region
      %64 = dma.done [#allocation14], 128
    $region25: #{tpu_custom_call.1} parent=1 // pred_fallthru
      _
    %s65 = sadd.s32 0, 0
    %p66 = scmp.lt.s32.totalorder %s65, 0
    %s67 = scalar_select %p66, %s65, 0
    %s68 = sadd.s32 0, 0
    %p69 = scmp.lt.s32.totalorder %s68, 0
    %s70 = scalar_select %p69, %s68, 0
    %s71 = sadd.s32 0, 0
    %p72 = scmp.lt.s32.totalorder %s71, 0
    %s73 = scalar_select %p72, %s71, 0
    %p74 = scmp.eq.s32.totalorder 0, 0
    %p75 = scmp.eq.s32.totalorder 0, 0
    %p76 = pnand %p74, %p75
    %p77 = pneg %p76
    // Predicated region
    $region26: #{tpu_custom_call.1} parent=1 // pred_check
      _
    $region27: #{tpu_custom_call.1} parent=1 // pred_check_branch
      %79 = sbr.rel (%p76) target = $region29
    $region28: #{tpu_custom_call.1} parent=1 // pred_region
      %vm80 = vcmask 0
      %81 = vst.msk [vmem:[#allocation7] sm:$0x1] %vm80, 0.0
      %82 = vst.msk [vmem:[#allocation8] sm:$0x1] %vm80, 0.0
      %83 = vst.msk [vmem:[#allocation9] sm:$0x1] %vm80, 0.0
    $region29: #{tpu_custom_call.1} parent=1 // pred_fallthru
      _
    // Predicated region
    $region30: #{tpu_custom_call.1} parent=1 // pred_check
      %p84 = pneg %p75
    $region31: #{tpu_custom_call.1} parent=1 // pred_check_branch
      %86 = sbr.rel (%p84) target = $region33
    $region32: #{tpu_custom_call.1} parent=1 // pred_region
      %vm87 = vcmask 7168
      %88 = vst.msk [vmem:[#allocation2] sm:$0xff] %vm87, 0.0
      %89 = vst.msk [vmem:[#allocation3] sm:$0xff] %vm87, 0.0
      %90 = vst.msk [vmem:[#allocation4] sm:$0xff] %vm87, 0.0
      %91 = vst.msk [vmem:[#allocation5] sm:$0xff] %vm87, 0.0
      %92 = vst.msk [vmem:[#allocation6] sm:$0xff] %vm87, 0.0
    $region33: #{tpu_custom_call.1} parent=1 // pred_fallthru
      _
    %v93 = vld [vmem:[#allocation10] sm:$0xff]
    %v94 = vld [vmem:[#allocation13] sm:$0xff]
    %v95 = vld [vmem:[#allocation15] sm:$0xff]
    %v96 = vld [vmem:[#allocation2] sm:$0xff]
    %v97 = vmul.f32 %v93, %v94
    %vm98 = vcmask 261120
    %v99 = vsel %vm98, %v97, 0.0
    %100 = vadd.xlane.f32.xlu0 %v99
    %v101 = vpop.xlane.xlu0 %100
    %v102 = vadd.f32 %v96, %v101
    %vm103 = vcmask 7168
    %104 = vst.msk [vmem:[#allocation2] sm:$0xff] %vm103, %v102
    %v105 = vld [vmem:[#allocation3] sm:$0xff]
    %v106 = vmul.f32 %v93, %v95
    %v107 = vsel %vm98, %v106, 0.0
    %108 = vadd.xlane.f32.xlu0 %v107
    %v109 = vpop.xlane.xlu0 %108
    %v110 = vadd.f32 %v105, %v109
    %111 = vst.msk [vmem:[#allocation3] sm:$0xff] %vm103, %v110
    %v112 = vld [vmem:[#allocation4] sm:$0xff]
    %v113 = vmul.f32 %v93, %v93
    %v114 = vsel %vm98, %v113, 0.0
    %115 = vadd.xlane.f32.xlu0 %v114
    %v116 = vpop.xlane.xlu0 %115
    %v117 = vadd.f32 %v112, %v116
    %118 = vst.msk [vmem:[#allocation4] sm:$0xff] %vm103, %v117
    %v119 = vld [vmem:[#allocation5] sm:$0xff]
    %v120 = vmul.f32 %v94, %v94
    %v121 = vsel %vm98, %v120, 0.0
    %122 = vadd.xlane.f32.xlu0 %v121
    %v123 = vpop.xlane.xlu0 %122
    %v124 = vadd.f32 %v119, %v123
    %125 = vst.msk [vmem:[#allocation5] sm:$0xff] %vm103, %v124
    %v126 = vld [vmem:[#allocation6] sm:$0xff]
    %v127 = vmul.f32 %v95, %v95
    %v128 = vsel %vm98, %v127, 0.0
    %129 = vadd.xlane.f32.xlu0 %v128
    %v130 = vpop.xlane.xlu0 %129
    %v131 = vadd.f32 %v126, %v130
    %132 = vst.msk [vmem:[#allocation6] sm:$0xff] %vm103, %v131
    // Predicated region
    $region34: #{tpu_custom_call.1} parent=1 // pred_check
      %p133 = pneg %p75
    $region35: #{tpu_custom_call.1} parent=1 // pred_check_branch
      %135 = sbr.rel (%p133) target = $region37
    $region36: #{tpu_custom_call.1} parent=1 // pred_region
      %v136 = vld [vmem:[#allocation4] sm:$0xff]
      %v137 = vmax.f32 %v136, 1e-12
      %v138 = vld [vmem:[#allocation2] sm:$0xff]
      %v139 = vld [vmem:[#allocation5] sm:$0xff]
      %v140 = vmax.f32 %v139, 1e-12
      %v141 = vmul.f32 %v137, %v140
      %v142 = vrsqrt.pop %v141
      %v143 = vmul.f32 %v138, %v142
      %v144 = vld [vmem:[#allocation3] sm:$0xff]
      %v145 = vld [vmem:[#allocation6] sm:$0xff]
      %v146 = vmax.f32 %v145, 1e-12
      %v147 = vmul.f32 %v137, %v146
      %v148 = vrsqrt.pop %v147
      %v149 = vmul.f32 %v144, %v148
      %s150 = sadd.s32 0, 0
      %p151 = scmp.lt.s32.totalorder %s150, 0
      %s152 = scalar_select %p151, %s150, 0
      %s153 = smul.u32 %s152, 8
      %v154 = vlaneseq
      %v155 = vshrl.u32 %v154, 7
      %v156 = vstv %s153
      %v157 = vadd.s32 %v156, %v155
      %vm158 = vcmp.lt.s32.totalorder %v157, 8
      %p159 = scmp.lt.s32.totalorder %s150, 1
      %s160 = scalar_select %p159, 1, 0
      %v161 = vstv %s160
      %vm162 = vcmp.eq.s32.totalorder %v161, 1
      %vm163 = vmand %vm158, %vm162
      %v164 = vsub.f32 %v143, 1.0
      %v165 = vmul.f32 %v164, 20.0
      %v166 = vmul.f32 %v165, 1.442695
      %v167 = vpow.pop %v166
      %v168 = vsel %vm163, %v167, 0.0
      %v169 = vsub.f32 %v149, 1.0
      %v170 = vmul.f32 %v169, 20.0
      %v171 = vmul.f32 %v170, 1.442695
      %v172 = vpow.pop %v171
      %v173 = vsel %vm163, %v172, 0.0
      %v174 = vsel %vm163, %v143, 0.0
      %v175 = vld [vmem:[#allocation7] sm:$0x1]
      %v176 = vsel %vm103, %v174, 0.0
      %v177 = vrot.slane %v176, 4
      %v178 = vadd.f32 %v176, %v177
      %v179 = vrot.slane %v178, 2
      %v180 = vadd.f32 %v178, %v179
      %v181 = vrot.slane %v180, 1
      %v182 = vadd.f32 %v180, %v181
      %v183 = vadd.f32 %v175, %v182
      %vm184 = vcmask 0
      %185 = vst.msk [vmem:[#allocation7] sm:$0x1] %vm184, %v183
      %v186 = vld [vmem:[#allocation8] sm:$0x1]
      %v187 = vsel %vm103, %v168, 0.0
      %v188 = vrot.slane %v187, 4
      %v189 = vadd.f32 %v187, %v188
      %v190 = vrot.slane %v189, 2
      %v191 = vadd.f32 %v189, %v190
      %v192 = vrot.slane %v191, 1
      %v193 = vadd.f32 %v191, %v192
      %v194 = vadd.f32 %v186, %v193
      %195 = vst.msk [vmem:[#allocation8] sm:$0x1] %vm184, %v194
      %v196 = vld [vmem:[#allocation9] sm:$0x1]
      %v197 = vsel %vm103, %v173, 0.0
      %v198 = vrot.slane %v197, 4
      %v199 = vadd.f32 %v197, %v198
      %v200 = vrot.slane %v199, 2
      %v201 = vadd.f32 %v199, %v200
      %v202 = vrot.slane %v201, 1
      %v203 = vadd.f32 %v201, %v202
      %v204 = vadd.f32 %v196, %v203
      %205 = vst.msk [vmem:[#allocation9] sm:$0x1] %vm184, %v204
    $region37: #{tpu_custom_call.1} parent=1 // pred_fallthru
      _
    // Predicated region
    $region38: #{tpu_custom_call.1} parent=1 // pred_check
      _
    $region39: #{tpu_custom_call.1} parent=1 // pred_check_branch
      %207 = sbr.rel (%p76) target = $region41
    $region40: #{tpu_custom_call.1} parent=1 // pred_region
      %v208 = vld [vmem:[#allocation7] sm:$0x1]
      %v209 = vld [vmem:[#allocation8] sm:$0x1]
      %v210 = vld [vmem:[#allocation9] sm:$0x1]
      %v212 = vlaneseq
      %v213 = vshrl.u32 %v212, 7
      %v214 = vsub.s32 0, %v213
      %v215 = vrot.slane %v209, %v214
      %v218 = vlaneseq
      %v219 = vshrl.u32 %v218, 7
      %v220 = vsub.s32 0, %v219
      %v221 = vrot.slane %v210, %v220
      %vm223 = vcmask 1040384
      %v224 = vsel %vm223, %v208, %v215
      %vm225 = vcmask 1041408
      %v226 = vsel %vm225, %v224, %v221
      %vm227 = vcmask 1042432
      %v228 = vsel %vm227, %v226, 0.0
      %230 = vset.pattern.permute.xlu0 0
      %231 = vperm.xlu0 %230, %v228
      %v232 = vpop.permute.xlu0 %231
      %234 = vst [vmem:[#allocation16] sm:$0xff] %v232
    $region41: #{tpu_custom_call.1} parent=1 // pred_fallthru
      _
    // Predicated region
    $region42: #{tpu_custom_call.1} parent=1 // pred_check
      _
    $region43: #{tpu_custom_call.1} parent=1 // pred_check_branch
      %236 = sbr.rel (0) target = $region45
    $region44: #{tpu_custom_call.1} parent=1 // pred_region
      %s238 = ssub.s32 128, 128
      %239 = vsyncadd [#allocation12], %s238
      %s241 = sshll.u32 [#allocation16], 4
      %s242 = int_to_ptr.vmem [resolvable:$true] %s241
      %244 = dma.vmem_to_hbm [thread:$0]  %s242, 128, %s3, [#allocation12]
    $region45: #{tpu_custom_call.1} parent=1 // pred_fallthru
      _
    // Predicated region
    $region46: #{tpu_custom_call.1} parent=1 // pred_check
      _
    $region47: #{tpu_custom_call.1} parent=1 // pred_check_branch
      %246 = sbr.rel (0) target = $region49
    $region48: #{tpu_custom_call.1} parent=1 // pred_region
      %247 = dma.done [#allocation12], 128
    $region49: #{tpu_custom_call.1} parent=1 // pred_fallthru
      _
    %248 = vsyncpa [#allocation11], 1
    %249 = vsyncpa [#allocation14], 1
    %250 = vsyncpa [#allocation12], 1

</llo_original>
